<compile_context>
chip_gen: v7x
topology: tpu7x:2x2x1
jax: 0.10.0
libtpu: 0.0.40
codegen_flags: <defaults>
</compile_context>

<pallas_src>
import jax
import jax.numpy as jnp
from jax import lax
from jax.experimental import pallas as pl
from jax.experimental.pallas import tpu as pltpu

# ----- Str2MSA default hyper-parameters -----
D_MSA = 64
D_STATE = 32
INNER_DIM = 32                      # d_k per attention head
DISTBIN = (8.0, 12.0, 16.0, 20.0)
DISTBIN2 = tuple(d * d for d in DISTBIN)
N_HEAD = len(DISTBIN)
D_V = D_MSA // N_HEAD               # 16 value dims per head
R_FF = 4
D_FF = D_MSA * R_FF
EPS = 1e-5
NEG_INF = float(jnp.finfo(jnp.float32).min)
SCALING = 1.0 / (INNER_DIM ** 0.5)
BF16 = jnp.bfloat16


def _layer_norm(x, gamma, beta):
    """nn.LayerNorm semantics (biased var, eps inside sqrt); rsqrt on the EUP."""
    mean = jnp.mean(x, axis=-1, keepdims=True)
    xc = x - mean
    var = jnp.mean(xc * xc, axis=-1, keepdims=True)
    return xc * (gamma * lax.rsqrt(var + EPS)) + beta


def _tpu_vmem_capacity():
    try:
        return int(pltpu.get_tpu_info().vmem_capacity_bytes)
    except Exception:                       # no TPU info / older API
        return 64 * 1024 * 1024             # conservative (v7x per-core VMEM)


def _default_seq_tile(n_seq):
    # Wide-MXU targets from the review: seq_tile*d_v >= 256 on 128-MiB chips
    # (v5e/v6e), >= 128 on the 64-MiB v7x.  Pick the largest divisor of N.
    target = 16 if _tpu_vmem_capacity() >= (100 << 20) else 8
    for t in range(min(n_seq, target), 0, -1):
        if n_seq % t == 0:
            return t
    return 1


# =====================================================================
# Stage 1: attention probabilities, once per batch element.
# =====================================================================
def attn_probs_kernel(d2_ref, state_ref, gs_ref, bs_ref, wqk_ref, bqk_ref,
                      attn_ref):
    d2 = d2_ref[0]                                     # (L, L) squared CA-CA dist
    state_n = _layer_norm(state_ref[0], gs_ref[...], bs_ref[...])   # (L, 32)

    # Fused Q/K projection: one (L, 32) x (32, 2*H*d_k=256) MXU matmul.
    qk = jnp.dot(state_n.astype(BF16), wqk_ref[...],
                 preferred_element_type=jnp.float32) + bqk_ref[...]
    qk = qk.astype(BF16)                               # (L, 256)
    hk = N_HEAD * INNER_DIM

    for h in range(N_HEAD):
        q_h = qk[:, h * INNER_DIM:(h + 1) * INNER_DIM]             # (L, d_k)
        k_h = qk[:, hk + h * INNER_DIM:hk + (h + 1) * INNER_DIM]   # (L, d_k)
        logits = lax.dot_general(q_h, k_h, (((1,), (1,)), ((), ())),
                                 preferred_element_type=jnp.float32)  # (L, L)
        # mask_h < 0.5  <=>  1 - sigmoid(dist - bin) < 0.5  <=>  d2 > bin^2
        logits = jnp.where(d2 > DISTBIN2[h], NEG_INF, logits)
        logits = logits - jnp.max(logits, axis=-1, keepdims=True)
        p = jnp.exp(logits)
        inv = pl.reciprocal(jnp.sum(p, axis=-1, keepdims=True), approx=True)
        attn_ref[0, h] = (p * inv).astype(BF16)


def _attn_probs(d2, state, p):
    B, L, _ = d2.shape
    # 1/sqrt(d_k) folded into the q half of the fused weight / bias.
    wqk = jnp.concatenate([p['wq'] * SCALING, p['wk']], axis=1).astype(BF16)
    bqk = jnp.concatenate([p['bq'] * SCALING, p['bk']], axis=1)
    consts = [p['gs'], p['bs'], wqk, bqk]

    def cspec(w):
        nz = (0,) * w.ndim
        return pl.BlockSpec(w.shape, lambda b, nz=nz: nz)

    return pl.pallas_call(
        attn_probs_kernel,
        out_shape=jax.ShapeDtypeStruct((B, N_HEAD, L, L), BF16),
        grid=(B,),
        in_specs=[pl.BlockSpec((1, L, L), lambda b: (b, 0, 0)),
                  pl.BlockSpec((1, L, state.shape[-1]), lambda b: (b, 0, 0))]
                 + [cspec(w) for w in consts],
        out_specs=pl.BlockSpec((1, N_HEAD, L, L), lambda b: (b, 0, 0, 0)),
        compiler_params=pltpu.CompilerParams(
            dimension_semantics=("parallel",)),
    )(d2, state, *consts)


# =====================================================================
# Stage 2: per (batch, N-tile) MSA update.
# =====================================================================
def str2msa_kernel(attn_ref, msa_ref,
                   g1_ref, b1_ref, wv_ref, bv_ref, wo_ref, bo_ref,
                   g2_ref, b2_ref, wf1_ref, bf1_ref, wf2_ref, bf2_ref,
                   out_ref):
    msa = msa_ref[0]                           # (TN, L, D) f32
    TN, L, D = msa.shape
    msa_rows = msa.reshape(TN * L, D)          # rows (n, l); leading reshape = free

    # ---- norm1 + V projection ----
    msa_n = _layer_norm(msa_rows, g1_ref[...], b1_ref[...])
    v = jnp.dot(msa_n.astype(BF16), wv_ref[...],
                preferred_element_type=jnp.float32) + bv_ref[...]
    v = v.astype(BF16).reshape(TN, L, D)       # [n, m, (h, j)]

    # ---- single relayout pass: [n, m, (h, j)] -> [n, (h, j), m] ----
    # Per-sequence 2-D transposes (XLU) + stack: TN full-width ops instead of
    # O(H*TN) sub-vreg lane concatenates.
    vT = jnp.stack([v[n].T for n in range(TN)], axis=0)      # (TN, D, L) bf16

    # ---- per-head PV: one wide matmul per head ----
    outs = []
    for h in range(N_HEAD):
        # rhs rows = (n, j), minor dim = m  (8-aligned sublane slice + free merge)
        rhs_h = vT[:, h * D_V:(h + 1) * D_V, :].reshape(TN * D_V, L)
        attn_h = attn_ref[0, h]                               # (l, m) bf16
        o_h = lax.dot_general(attn_h, rhs_h, (((1,), (1,)), ((), ())),
                              preferred_element_type=jnp.float32)  # (L, TN*D_V)
        # back to [n, j, l] (bf16 halves the relayout bytes; it is cast to bf16
        # before the output projection anyway).
        outs.append(o_h.astype(BF16).T.reshape(TN, D_V, L))
    oT = jnp.concatenate(outs, axis=1)                        # (TN, D, L): [n, (h,j), l]
    attn_rows = jnp.concatenate([oT[n].T for n in range(TN)], axis=0)  # (TN*L, D)

    # ---- output projection + residual 1 (dropout1 = identity in eval mode) ----
    ao = jnp.dot(attn_rows, wo_ref[...],
                 preferred_element_type=jnp.float32) + bo_ref[...]
    msa_rows = msa_rows + ao

    # ---- feed-forward block + residual 2 (dropout2 = identity) ----
    msa2 = _layer_norm(msa_rows, g2_ref[...], b2_ref[...])
    h1 = jnp.maximum(
        jnp.dot(msa2.astype(BF16), wf1_ref[...],
                preferred_element_type=jnp.float32) + bf1_ref[...],
        0.0).astype(BF16)                      # bf16 immediately: largest FF temp
    h2 = jnp.dot(h1, wf2_ref[...],
                 preferred_element_type=jnp.float32) + bf2_ref[...]
    msa_rows = msa_rows + h2

    out_ref[0] = msa_rows.reshape(TN, L, D)


def str2msa_forward(msa, xyz, state, p, *, seq_tile=None):
    B, N, L, D = msa.shape
    assert D == D_MSA
    if seq_tile is None:
        seq_tile = _default_seq_tile(N)
    assert N % seq_tile == 0, "seq_tile must divide N"
    n_blocks = N // seq_tile

    # Lane-dense squared CA-CA distances (B, L, L); the mask only needs
    # d2 > bin^2, so no sqrt / sigmoid anywhere.
    ca = xyz[:, :, 1]                                                   # (B, L, 3)
    d2 = jnp.sum((ca[:, :, None, :] - ca[:, None, :, :]) ** 2, axis=-1)  # (B, L, L)

    # Stage 1: attention probabilities, once per batch element (bf16).
    attn = _attn_probs(d2, state, p)                                    # (B, H, L, L)

    # Matmul weights pre-cast to bf16 (f32 accumulation in-kernel).
    weights = [
        p['g1'], p['b1'],
        p['wv'].astype(BF16), p['bv'],
        p['wo'].astype(BF16), p['bo'],
        p['g2'], p['b2'],
        p['wf1'].astype(BF16), p['bf1'],
        p['wf2'].astype(BF16), p['bf2'],
    ]

    # attn block is constant across the N-tile axis -> fetched once per batch
    # element (pipeline skips re-DMA when the block index does not change).
    attn_spec = pl.BlockSpec((1, N_HEAD, L, L), lambda b, n: (b, 0, 0, 0))
    msa_spec = pl.BlockSpec((1, seq_tile, L, D), lambda b, n: (b, n, 0, 0))

    def wspec(w):
        nz = (0,) * w.ndim
        return pl.BlockSpec(w.shape, lambda b, n, nz=nz: nz)

    # Generation-aware VMEM budget: ~60% of per-core VMEM, capped at 100 MiB
    # (v5e/v6e: 128 MiB -> ~77 MiB; v7x: 64 MiB -> ~38 MiB).
    cap = _tpu_vmem_capacity()
    vmem_limit = max(32 * 1024 * 1024, min(int(cap * 0.6), 100 * 1024 * 1024))

    return pl.pallas_call(
        str2msa_kernel,
        out_shape=jax.ShapeDtypeStruct(msa.shape, msa.dtype),
        grid=(B, n_blocks),
        in_specs=[attn_spec, msa_spec] + [wspec(w) for w in weights],
        out_specs=msa_spec,
        compiler_params=pltpu.CompilerParams(
            dimension_semantics=("parallel", "parallel"),
            vmem_limit_bytes=vmem_limit),
    )(attn, msa, *weights)


# ---------- deterministic parameter init (shapes from Str2MSA.__init__) ----------
def init_params(key):
    ks = jax.random.split(key, 6)

    def lin(k, din, dout):
        kw, kb = jax.random.split(k)
        w = jax.random.normal(kw, (din, dout), jnp.float32) * (1.0 / (din ** 0.5))
        b = jax.random.normal(kb, (1, dout), jnp.float32) * 0.02
        return w, b

    p = {
        'gs': jnp.ones((1, D_STATE), jnp.float32), 'bs': jnp.zeros((1, D_STATE), jnp.float32),
        'g1': jnp.ones((1, D_MSA), jnp.float32),   'b1': jnp.zeros((1, D_MSA), jnp.float32),
        'g2': jnp.ones((1, D_MSA), jnp.float32),   'b2': jnp.zeros((1, D_MSA), jnp.float32),
    }
    p['wq'], p['bq'] = lin(ks[0], D_STATE, N_HEAD * INNER_DIM)
    p['wk'], p['bk'] = lin(ks[1], D_STATE, N_HEAD * INNER_DIM)
    p['wv'], p['bv'] = lin(ks[2], D_MSA, D_MSA)
    p['wo'], p['bo'] = lin(ks[3], D_MSA, D_MSA)
    p['wf1'], p['bf1'] = lin(ks[4], D_MSA, D_FF)
    p['wf2'], p['bf2'] = lin(ks[5], D_FF, D_MSA)
    return p


# ---------- plain-JAX reference (mirrors the PyTorch forward, f32 throughout) ----------
def str2msa_reference(msa, xyz, state, p):
    def ln(x, g, b):
        g = g.reshape((1,) * (x.ndim - 1) + (-1,))
        b = b.reshape((1,) * (x.ndim - 1) + (-1,))
        m = x.mean(-1, keepdims=True)
        v = ((x - m) ** 2).mean(-1, keepdims=True)
        return g * (x - m) / jnp.sqrt(v + EPS) + b

    B, N, L, D = msa.shape
    ca = xyz[:, :, 1]
    dist = jnp.sqrt(jnp.sum((ca[:, :, None, :] - ca[:, None, :, :]) ** 2, axis=-1))
    mask = jnp.stack([1.0 - jax.nn.sigmoid(dist - db) for db in DISTBIN], axis=1)

    state_n = ln(state, p['gs'], p['bs'])
    msa_n = ln(msa, p['g1'], p['b1'])
    q = (state_n @ p['wq'] + p['bq']).reshape(B, L, N_HEAD, INNER_DIM).transpose(0, 2, 1, 3)
    k = (state_n @ p['wk'] + p['bk']).reshape(B, L, N_HEAD, INNER_DIM).transpose(0, 2, 1, 3)
    v = (msa_n @ p['wv'] + p['bv']).reshape(B, N, L, N_HEAD, D // N_HEAD).transpose(0, 3, 1, 2, 4)
    logits = jnp.einsum('bhid,bhjd->bhij', q * SCALING, k)
    logits = jnp.where(mask < 0.5, NEG_INF, logits)
    attn = jax.nn.softmax(logits, axis=-1)
    out = jnp.einsum('bhij,bhnjk->bhnik', attn, v)
    out = out.transpose(0, 2, 3, 1, 4).reshape(B, N, L, D)
    out = out @ p['wo'] + p['bo']
    msa = msa + out
    msa2 = ln(msa, p['g2'], p['b2'])
    h1 = jax.nn.relu(msa2 @ p['wf1'] + p['bf1'])
    msa = msa + (h1 @ p['wf2'] + p['bf2'])
    return msa


if __name__ == "__main__":
    key = jax.random.PRNGKey(0)
    k1, k2, k3, kp = jax.random.split(key, 4)

    B, N, L = 2, 8, 16
    msa = jax.random.normal(k1, (B, N, L, D_MSA), jnp.float32)
    xyz = jax.random.normal(k2, (B, L, 3, 3), jnp.float32) * 5.0
    state = jax.random.normal(k3, (B, L, D_STATE), jnp.float32)
    params = init_params(kp)

    # seq_tile=4 exercises the second (N-tile) parallel grid axis (2 blocks).
    out = str2msa_forward(msa, xyz, state, params, seq_tile=4)
    out = jax.block_until_ready(out)

    ref = str2msa_reference(msa, xyz, state, params)
    err = float(jnp.max(jnp.abs(out - ref)))
    # Tolerance accounts for bf16 MXU operands / bf16 attention probabilities
    # (f32 accumulation) and the approximate EUP reciprocal in the softmax.
    assert err < 5e-2, f"kernel/reference mismatch, max abs err = {err}"
    print("KERNEL_OK")
</pallas_src>

<mosaic_0001>
module attributes {stable_mosaic.version = 11 : i64} {
  func.func @attn_probs_kernel(%arg0: i32, %arg1: memref<1x16x16xf32, #tpu.memory_space<vmem>>, %arg2: memref<1x16x32xf32, #tpu.memory_space<vmem>>, %arg3: memref<1x32xf32, #tpu.memory_space<vmem>>, %arg4: memref<1x32xf32, #tpu.memory_space<vmem>>, %arg5: memref<32x256xbf16, #tpu.memory_space<vmem>>, %arg6: memref<1x256xf32, #tpu.memory_space<vmem>>, %arg7: memref<1x4x16x16xbf16, #tpu.memory_space<vmem>>) attributes {dimension_semantics = [#tpu.dimension_semantics<parallel>], iteration_bounds = array<i64: 2>, scalar_prefetch = 0 : i64, scratch_operands = 0 : i64, tpu.core_type = #tpu.core_type<tc>, window_params = [{transform_indices = @transform_0, window_bounds = array<i64: 1, 16, 16>}, {transform_indices = @transform_1, window_bounds = array<i64: 1, 16, 32>}, {pipeline_mode = #tpu.pipeline_mode<synchronous>, transform_indices = @transform_2, window_bounds = array<i64: 1, 32>}, {pipeline_mode = #tpu.pipeline_mode<synchronous>, transform_indices = @transform_3, window_bounds = array<i64: 1, 32>}, {pipeline_mode = #tpu.pipeline_mode<synchronous>, transform_indices = @transform_4, window_bounds = array<i64: 32, 256>}, {pipeline_mode = #tpu.pipeline_mode<synchronous>, transform_indices = @transform_5, window_bounds = array<i64: 1, 256>}, {transform_indices = @transform_6, window_bounds = array<i64: 1, 4, 16, 16>}]} {
    %c0 = arith.constant 0 : index
    %c0_0 = arith.constant 0 : index
    %c0_1 = arith.constant 0 : index
    %0 = vector.load %arg1[%c0, %c0_0, %c0_1] : memref<1x16x16xf32, #tpu.memory_space<vmem>>, vector<1x16x16xf32>
    %1 = vector.shape_cast %0 : vector<1x16x16xf32> to vector<16x16xf32>
    %c0_2 = arith.constant 0 : index
    %c0_3 = arith.constant 0 : index
    %c0_4 = arith.constant 0 : index
    %2 = vector.load %arg2[%c0_2, %c0_3, %c0_4] : memref<1x16x32xf32, #tpu.memory_space<vmem>>, vector<1x16x32xf32>
    %3 = vector.shape_cast %2 : vector<1x16x32xf32> to vector<16x32xf32>
    %c0_5 = arith.constant 0 : index
    %c0_6 = arith.constant 0 : index
    %4 = vector.load %arg3[%c0_5, %c0_6] : memref<1x32xf32, #tpu.memory_space<vmem>>, vector<1x32xf32>
    %c0_7 = arith.constant 0 : index
    %c0_8 = arith.constant 0 : index
    %5 = vector.load %arg4[%c0_7, %c0_8] : memref<1x32xf32, #tpu.memory_space<vmem>>, vector<1x32xf32>
    %cst = arith.constant dense<0.000000e+00> : vector<16xf32>
    %6 = vector.multi_reduction <add>, %3, %cst [1] : vector<16x32xf32> to vector<16xf32>
    %7 = vector.shape_cast %6 : vector<16xf32> to vector<16x1xf32>
    %cst_9 = arith.constant 3.200000e+01 : f32
    %8 = vector.broadcast %cst_9 : f32 to vector<16x1xf32>
    %9 = arith.divf %7, %8 : vector<16x1xf32>
    %10 = vector.broadcast %9 : vector<16x1xf32> to vector<16x32xf32>
    %11 = arith.subf %3, %10 : vector<16x32xf32>
    %12 = arith.mulf %11, %11 : vector<16x32xf32>
    %cst_10 = arith.constant dense<0.000000e+00> : vector<16xf32>
    %13 = vector.multi_reduction <add>, %12, %cst_10 [1] : vector<16x32xf32> to vector<16xf32>
    %14 = vector.shape_cast %13 : vector<16xf32> to vector<16x1xf32>
    %cst_11 = arith.constant 3.200000e+01 : f32
    %15 = vector.broadcast %cst_11 : f32 to vector<16x1xf32>
    %16 = arith.divf %14, %15 : vector<16x1xf32>
    %cst_12 = arith.constant 9.99999974E-6 : f32
    %17 = vector.broadcast %cst_12 : f32 to vector<16x1xf32>
    %18 = arith.addf %16, %17 : vector<16x1xf32>
    %19 = math.rsqrt %18 : vector<16x1xf32>
    %20 = vector.broadcast %4 : vector<1x32xf32> to vector<16x32xf32>
    %21 = vector.broadcast %19 : vector<16x1xf32> to vector<16x32xf32>
    %22 = arith.mulf %20, %21 : vector<16x32xf32>
    %23 = arith.mulf %11, %22 : vector<16x32xf32>
    %24 = vector.broadcast %5 : vector<1x32xf32> to vector<16x32xf32>
    %25 = arith.addf %23, %24 : vector<16x32xf32>
    %26 = arith.truncf %25 : vector<16x32xf32> to vector<16x32xbf16>
    %c0_13 = arith.constant 0 : index
    %c0_14 = arith.constant 0 : index
    %27 = vector.load %arg5[%c0_13, %c0_14] : memref<32x256xbf16, #tpu.memory_space<vmem>>, vector<32x256xbf16>
    %cst_15 = arith.constant dense<0.000000e+00> : vector<16x256xf32>
    %28 = tpu.matmul %26, %27, %cst_15 {dimension_numbers = #tpu.dot_dimension_numbers<[1], [0], [0], [1], [0, 0, 1, 1], [], []>} : vector<16x32xbf16>, vector<32x256xbf16>, vector<16x256xf32> -> vector<16x256xf32>
    %c0_16 = arith.constant 0 : index
    %c0_17 = arith.constant 0 : index
    %29 = vector.load %arg6[%c0_16, %c0_17] : memref<1x256xf32, #tpu.memory_space<vmem>>, vector<1x256xf32>
    %30 = vector.broadcast %29 : vector<1x256xf32> to vector<16x256xf32>
    %31 = arith.addf %28, %30 : vector<16x256xf32>
    %32 = arith.truncf %31 : vector<16x256xf32> to vector<16x256xbf16>
    %33 = vector.extract_strided_slice %32 {offsets = [0, 0], sizes = [16, 32], strides = [1, 1]} : vector<16x256xbf16> to vector<16x32xbf16>
    %34 = vector.extract_strided_slice %32 {offsets = [0, 128], sizes = [16, 32], strides = [1, 1]} : vector<16x256xbf16> to vector<16x32xbf16>
    %cst_18 = arith.constant dense<0.000000e+00> : vector<16x16xf32>
    %35 = tpu.matmul %33, %34, %cst_18 {dimension_numbers = #tpu.dot_dimension_numbers<[1], [1], [0], [0], [0, 0, 1, 0], [], []>} : vector<16x32xbf16>, vector<16x32xbf16>, vector<16x16xf32> -> vector<16x16xf32>
    %cst_19 = arith.constant 6.400000e+01 : f32
    %36 = vector.broadcast %cst_19 : f32 to vector<16x16xf32>
    %37 = arith.cmpf ogt, %1, %36 : vector<16x16xf32>
    %cst_20 = arith.constant -3.40282347E+38 : f32
    %38 = vector.broadcast %cst_20 : f32 to vector<16x16xf32>
    %39 = arith.select %37, %38, %35 : vector<16x16xi1>, vector<16x16xf32>
    %cst_21 = arith.constant dense<0xFF800000> : vector<16xf32>
    %40 = vector.multi_reduction <maximumf>, %39, %cst_21 [1] : vector<16x16xf32> to vector<16xf32>
    %41 = vector.shape_cast %40 : vector<16xf32> to vector<16x1xf32>
    %42 = vector.broadcast %41 : vector<16x1xf32> to vector<16x16xf32>
    %43 = arith.subf %39, %42 : vector<16x16xf32>
    %44 = math.exp %43 : vector<16x16xf32>
    %cst_22 = arith.constant dense<0.000000e+00> : vector<16xf32>
    %45 = vector.multi_reduction <add>, %44, %cst_22 [1] : vector<16x16xf32> to vector<16xf32>
    %46 = vector.shape_cast %45 : vector<16xf32> to vector<16x1xf32>
    %47 = tpu.reciprocal %46 {approx = true} : vector<16x1xf32> -> vector<16x1xf32>
    %48 = vector.broadcast %47 : vector<16x1xf32> to vector<16x16xf32>
    %49 = arith.mulf %44, %48 : vector<16x16xf32>
    %50 = arith.truncf %49 : vector<16x16xf32> to vector<16x16xbf16>
    %c0_23 = arith.constant 0 : index
    %c0_24 = arith.constant 0 : index
    %c0_25 = arith.constant 0 : index
    %c0_26 = arith.constant 0 : index
    %51 = vector.load %arg7[%c0_23, %c0_24, %c0_25, %c0_26] : memref<1x4x16x16xbf16, #tpu.memory_space<vmem>>, vector<1x1x16x16xbf16>
    %52 = vector.shape_cast %51 : vector<1x1x16x16xbf16> to vector<16x16xbf16>
    %53 = vector.shape_cast %50 : vector<16x16xbf16> to vector<1x1x16x16xbf16>
    tpu.vector_store %arg7[%c0_23, %c0_24, %c0_25, %c0_26], %53 {strides = array<i32>} : memref<1x4x16x16xbf16, #tpu.memory_space<vmem>>, vector<1x1x16x16xbf16>,
    %54 = vector.extract_strided_slice %32 {offsets = [0, 32], sizes = [16, 32], strides = [1, 1]} : vector<16x256xbf16> to vector<16x32xbf16>
    %55 = vector.extract_strided_slice %32 {offsets = [0, 160], sizes = [16, 32], strides = [1, 1]} : vector<16x256xbf16> to vector<16x32xbf16>
    %cst_27 = arith.constant dense<0.000000e+00> : vector<16x16xf32>
    %56 = tpu.matmul %54, %55, %cst_27 {dimension_numbers = #tpu.dot_dimension_numbers<[1], [1], [0], [0], [0, 0, 1, 0], [], []>} : vector<16x32xbf16>, vector<16x32xbf16>, vector<16x16xf32> -> vector<16x16xf32>
    %cst_28 = arith.constant 1.440000e+02 : f32
    %57 = vector.broadcast %cst_28 : f32 to vector<16x16xf32>
    %58 = arith.cmpf ogt, %1, %57 : vector<16x16xf32>
    %cst_29 = arith.constant -3.40282347E+38 : f32
    %59 = vector.broadcast %cst_29 : f32 to vector<16x16xf32>
    %60 = arith.select %58, %59, %56 : vector<16x16xi1>, vector<16x16xf32>
    %cst_30 = arith.constant dense<0xFF800000> : vector<16xf32>
    %61 = vector.multi_reduction <maximumf>, %60, %cst_30 [1] : vector<16x16xf32> to vector<16xf32>
    %62 = vector.shape_cast %61 : vector<16xf32> to vector<16x1xf32>
    %63 = vector.broadcast %62 : vector<16x1xf32> to vector<16x16xf32>
    %64 = arith.subf %60, %63 : vector<16x16xf32>
    %65 = math.exp %64 : vector<16x16xf32>
    %cst_31 = arith.constant dense<0.000000e+00> : vector<16xf32>
    %66 = vector.multi_reduction <add>, %65, %cst_31 [1] : vector<16x16xf32> to vector<16xf32>
    %67 = vector.shape_cast %66 : vector<16xf32> to vector<16x1xf32>
    %68 = tpu.reciprocal %67 {approx = true} : vector<16x1xf32> -> vector<16x1xf32>
    %69 = vector.broadcast %68 : vector<16x1xf32> to vector<16x16xf32>
    %70 = arith.mulf %65, %69 : vector<16x16xf32>
    %71 = arith.truncf %70 : vector<16x16xf32> to vector<16x16xbf16>
    %c0_32 = arith.constant 0 : index
    %c1 = arith.constant 1 : index
    %c0_33 = arith.constant 0 : index
    %c0_34 = arith.constant 0 : index
    %72 = vector.load %arg7[%c0_32, %c1, %c0_33, %c0_34] : memref<1x4x16x16xbf16, #tpu.memory_space<vmem>>, vector<1x1x16x16xbf16>
    %73 = vector.shape_cast %72 : vector<1x1x16x16xbf16> to vector<16x16xbf16>
    %74 = vector.shape_cast %71 : vector<16x16xbf16> to vector<1x1x16x16xbf16>
    tpu.vector_store %arg7[%c0_32, %c1, %c0_33, %c0_34], %74 {strides = array<i32>} : memref<1x4x16x16xbf16, #tpu.memory_space<vmem>>, vector<1x1x16x16xbf16>,
    %75 = vector.extract_strided_slice %32 {offsets = [0, 64], sizes = [16, 32], strides = [1, 1]} : vector<16x256xbf16> to vector<16x32xbf16>
    %76 = vector.extract_strided_slice %32 {offsets = [0, 192], sizes = [16, 32], strides = [1, 1]} : vector<16x256xbf16> to vector<16x32xbf16>
    %cst_35 = arith.constant dense<0.000000e+00> : vector<16x16xf32>
    %77 = tpu.matmul %75, %76, %cst_35 {dimension_numbers = #tpu.dot_dimension_numbers<[1], [1], [0], [0], [0, 0, 1, 0], [], []>} : vector<16x32xbf16>, vector<16x32xbf16>, vector<16x16xf32> -> vector<16x16xf32>
    %cst_36 = arith.constant 2.560000e+02 : f32
    %78 = vector.broadcast %cst_36 : f32 to vector<16x16xf32>
    %79 = arith.cmpf ogt, %1, %78 : vector<16x16xf32>
    %cst_37 = arith.constant -3.40282347E+38 : f32
    %80 = vector.broadcast %cst_37 : f32 to vector<16x16xf32>
    %81 = arith.select %79, %80, %77 : vector<16x16xi1>, vector<16x16xf32>
    %cst_38 = arith.constant dense<0xFF800000> : vector<16xf32>
    %82 = vector.multi_reduction <maximumf>, %81, %cst_38 [1] : vector<16x16xf32> to vector<16xf32>
    %83 = vector.shape_cast %82 : vector<16xf32> to vector<16x1xf32>
    %84 = vector.broadcast %83 : vector<16x1xf32> to vector<16x16xf32>
    %85 = arith.subf %81, %84 : vector<16x16xf32>
    %86 = math.exp %85 : vector<16x16xf32>
    %cst_39 = arith.constant dense<0.000000e+00> : vector<16xf32>
    %87 = vector.multi_reduction <add>, %86, %cst_39 [1] : vector<16x16xf32> to vector<16xf32>
    %88 = vector.shape_cast %87 : vector<16xf32> to vector<16x1xf32>
    %89 = tpu.reciprocal %88 {approx = true} : vector<16x1xf32> -> vector<16x1xf32>
    %90 = vector.broadcast %89 : vector<16x1xf32> to vector<16x16xf32>
    %91 = arith.mulf %86, %90 : vector<16x16xf32>
    %92 = arith.truncf %91 : vector<16x16xf32> to vector<16x16xbf16>
    %c0_40 = arith.constant 0 : index
    %c2 = arith.constant 2 : index
    %c0_41 = arith.constant 0 : index
    %c0_42 = arith.constant 0 : index
    %93 = vector.load %arg7[%c0_40, %c2, %c0_41, %c0_42] : memref<1x4x16x16xbf16, #tpu.memory_space<vmem>>, vector<1x1x16x16xbf16>
    %94 = vector.shape_cast %93 : vector<1x1x16x16xbf16> to vector<16x16xbf16>
    %95 = vector.shape_cast %92 : vector<16x16xbf16> to vector<1x1x16x16xbf16>
    tpu.vector_store %arg7[%c0_40, %c2, %c0_41, %c0_42], %95 {strides = array<i32>} : memref<1x4x16x16xbf16, #tpu.memory_space<vmem>>, vector<1x1x16x16xbf16>,
    %96 = vector.extract_strided_slice %32 {offsets = [0, 96], sizes = [16, 32], strides = [1, 1]} : vector<16x256xbf16> to vector<16x32xbf16>
    %97 = vector.extract_strided_slice %32 {offsets = [0, 224], sizes = [16, 32], strides = [1, 1]} : vector<16x256xbf16> to vector<16x32xbf16>
    %cst_43 = arith.constant dense<0.000000e+00> : vector<16x16xf32>
    %98 = tpu.matmul %96, %97, %cst_43 {dimension_numbers = #tpu.dot_dimension_numbers<[1], [1], [0], [0], [0, 0, 1, 0], [], []>} : vector<16x32xbf16>, vector<16x32xbf16>, vector<16x16xf32> -> vector<16x16xf32>
    %cst_44 = arith.constant 4.000000e+02 : f32
    %99 = vector.broadcast %cst_44 : f32 to vector<16x16xf32>
    %100 = arith.cmpf ogt, %1, %99 : vector<16x16xf32>
    %cst_45 = arith.constant -3.40282347E+38 : f32
    %101 = vector.broadcast %cst_45 : f32 to vector<16x16xf32>
    %102 = arith.select %100, %101, %98 : vector<16x16xi1>, vector<16x16xf32>
    %cst_46 = arith.constant dense<0xFF800000> : vector<16xf32>
    %103 = vector.multi_reduction <maximumf>, %102, %cst_46 [1] : vector<16x16xf32> to vector<16xf32>
    %104 = vector.shape_cast %103 : vector<16xf32> to vector<16x1xf32>
    %105 = vector.broadcast %104 : vector<16x1xf32> to vector<16x16xf32>
    %106 = arith.subf %102, %105 : vector<16x16xf32>
    %107 = math.exp %106 : vector<16x16xf32>
    %cst_47 = arith.constant dense<0.000000e+00> : vector<16xf32>
    %108 = vector.multi_reduction <add>, %107, %cst_47 [1] : vector<16x16xf32> to vector<16xf32>
    %109 = vector.shape_cast %108 : vector<16xf32> to vector<16x1xf32>
    %110 = tpu.reciprocal %109 {approx = true} : vector<16x1xf32> -> vector<16x1xf32>
    %111 = vector.broadcast %110 : vector<16x1xf32> to vector<16x16xf32>
    %112 = arith.mulf %107, %111 : vector<16x16xf32>
    %113 = arith.truncf %112 : vector<16x16xf32> to vector<16x16xbf16>
    %c0_48 = arith.constant 0 : index
    %c3 = arith.constant 3 : index
    %c0_49 = arith.constant 0 : index
    %c0_50 = arith.constant 0 : index
    %114 = vector.load %arg7[%c0_48, %c3, %c0_49, %c0_50] : memref<1x4x16x16xbf16, #tpu.memory_space<vmem>>, vector<1x1x16x16xbf16>
    %115 = vector.shape_cast %114 : vector<1x1x16x16xbf16> to vector<16x16xbf16>
    %116 = vector.shape_cast %113 : vector<16x16xbf16> to vector<1x1x16x16xbf16>
    tpu.vector_store %arg7[%c0_48, %c3, %c0_49, %c0_50], %116 {strides = array<i32>} : memref<1x4x16x16xbf16, #tpu.memory_space<vmem>>, vector<1x1x16x16xbf16>,
    return
  }
  func.func @transform_0(%arg0: i32) -> (i32, i32, i32) {
    %c0_i32 = arith.constant 0 : i32
    %c0_i32_0 = arith.constant 0 : i32
    %c0_i32_1 = arith.constant 0 : i32
    return %arg0, %c0_i32, %c0_i32_0 : i32, i32, i32
  }
  func.func @transform_1(%arg0: i32) -> (i32, i32, i32) {
    %c0_i32 = arith.constant 0 : i32
    %c0_i32_0 = arith.constant 0 : i32
    %c0_i32_1 = arith.constant 0 : i32
    return %arg0, %c0_i32, %c0_i32_0 : i32, i32, i32
  }
  func.func @transform_2(%arg0: i32) -> (i32, i32) {
    %c0_i32 = arith.constant 0 : i32
    %c0_i32_0 = arith.constant 0 : i32
    %c0_i32_1 = arith.constant 0 : i32
    return %c0_i32, %c0_i32_0 : i32, i32
  }
  func.func @transform_3(%arg0: i32) -> (i32, i32) {
    %c0_i32 = arith.constant 0 : i32
    %c0_i32_0 = arith.constant 0 : i32
    %c0_i32_1 = arith.constant 0 : i32
    return %c0_i32, %c0_i32_0 : i32, i32
  }
  func.func @transform_4(%arg0: i32) -> (i32, i32) {
    %c0_i32 = arith.constant 0 : i32
    %c0_i32_0 = arith.constant 0 : i32
    %c0_i32_1 = arith.constant 0 : i32
    return %c0_i32, %c0_i32_0 : i32, i32
  }
  func.func @transform_5(%arg0: i32) -> (i32, i32) {
    %c0_i32 = arith.constant 0 : i32
    %c0_i32_0 = arith.constant 0 : i32
    %c0_i32_1 = arith.constant 0 : i32
    return %c0_i32, %c0_i32_0 : i32, i32
  }
  func.func @transform_6(%arg0: i32) -> (i32, i32, i32, i32) {
    %c0_i32 = arith.constant 0 : i32
    %c0_i32_0 = arith.constant 0 : i32
    %c0_i32_1 = arith.constant 0 : i32
    %c0_i32_2 = arith.constant 0 : i32
    return %arg0, %c0_i32, %c0_i32_0, %c0_i32_1 : i32, i32, i32, i32
  }
}

</mosaic_0001>

<llo_original>
// kernel: tpu_custom_call.1
$region0: #{tpu_custom_call.1}
  #allocation0 [shape = 'u32[]', space=smem, size = 0x4, offset = 0x4, fixed_abs, tag = 'smem constant byte address 0x4 - core index']
  #allocation1 [shape = 'u32[144,128]{1,0:T(1,128)}', space=vmem, size = 0x12000, scoped, tag = 'internal scratch']
  %s0 = inlined_call_operand.hbm [shape: f32[2,16,16], index: 0, kind: input, shape index: {}]
  %s1 = inlined_call_operand.hbm [shape: f32[2,16,32], index: 1, kind: input, shape index: {}]
  %s2 = inlined_call_operand.vmem [shape: f32[1,32], index: 2, kind: input, shape index: {}]
  %s3 = inlined_call_operand.vmem [shape: f32[1,32], index: 3, kind: input, shape index: {}]
  %s4 = inlined_call_operand.hbm [shape: bf16[32,256], index: 4, kind: input, shape index: {}]
  %s5 = inlined_call_operand.vmem [shape: f32[1,256], index: 5, kind: input, shape index: {}]
  %s6 = inlined_call_operand.hbm [shape: bf16[2,4,16,16], index: 6, kind: output, shape index: {}]
  %s7 = sld [smem:[#allocation0]]
  $region69: #{tpu_custom_call.1} parent=0
    _
  %s9 = ssub.s32 1, %s7
  %s10 = scalar_select 0, %s9, %s7
  $region1: #{tpu_custom_call.1} parent=0
    #allocation2 [shape = 'u8[16384]{0}', space=vmem, size = 0x4000, scoped, tag = 'input window, operand 0']
    #allocation3 [shape = 's32[2]{0}', space=sflag, size = 0x8, scoped, tag = 'scoped memory for tpu_custom_call.1']
    #allocation4 [shape = 's32[2]{0}', space=sflag, size = 0x8, scoped, tag = 'scoped memory for tpu_custom_call.1']
    #allocation5 [shape = 'u8[16384]{0}', space=vmem, size = 0x4000, scoped, tag = 'input window, operand 1']
    #allocation6 [shape = 's32[2]{0}', space=sflag, size = 0x8, scoped, tag = 'scoped memory for tpu_custom_call.1']
    #allocation7 [shape = 'u8[16384]{0}', space=vmem, size = 0x4000, scoped, tag = 'input window, operand 4, single buffered']
    #allocation8 [shape = 'u8[32768]{0}', space=vmem, size = 0x8000, scoped, tag = 'output window, operand 0']
    %11 = vsyncpa [#allocation3], 0
    %s12 = scalar_lea.sflag [#allocation3], 1
    %13 = vsyncpa %s12, 0
    %14 = vsyncpa [#allocation6], 0
    %s15 = scalar_lea.sflag [#allocation6], 1
    %16 = vsyncpa %s15, 0
    %17 = vsyncpa [#allocation4], 0
    %s18 = scalar_lea.sflag [#allocation4], 1
    %19 = vsyncpa %s18, 0
    loop: start=0, step=1, limit=4
    $region2: #{tpu_custom_call.1} parent=1 // loop_pre_header
      _
    $region3: #{tpu_custom_call.1} parent=1 // loop_header
      %s21 = sphi 0, %s25
      %p22 = scmp.ge.s32.totalorder %s21, 4
      %s31 = sphi 0, %s33
      %s34 = sphi 0, %s31
      %s35 = sphi 0, %s34
      %s51 = sphi 0, %s35
      %s57 = sphi 0, %s59
      %s60 = sphi 0, %s57
      %s61 = sphi 0, %s60
      %s77 = sphi 0, %s61
      %s81 = sphi 0, %s81
      %s83 = sphi 0, %s81
      %s84 = sphi 0, %s83
      %s98 = sphi 0, %s84
      %s102 = sphi 0, %s102
      %s104 = sphi 0, %s102
      %s105 = sphi 0, %s104
      %s119 = sphi 0, %s105
      %s123 = sphi 0, %s123
      %s125 = sphi 0, %s123
      %s126 = sphi 0, %s125
      %s140 = sphi 0, %s126
      %s144 = sphi 0, %s144
      %s146 = sphi 0, %s144
      %s147 = sphi 0, %s146
      %s161 = sphi 0, %s147
      %s167 = sphi 0, %s169
      %s170 = sphi 0, %s167
      %s171 = sphi 0, %s170
      %s187 = sphi 0, %s171
    $region4: #{tpu_custom_call.1} parent=1 // loop_header_branch
      %24 = sbr.rel (%p22) target = $region8
    $region5: #{tpu_custom_call.1} parent=1 // loop_body
      %s26 = ssub.s32 %s21, 1
      %s27 = ssub.s32 %s21, 2
      %s28 = sadd.s32 %s21, 1
      %s29 = ssub.s32 %s21, %s28
      %p30 = scmp.eq.s32.totalorder %s29, 0
      %s32 = sadd.s32 %s31, 1
      %s33 = scalar_select %p30, %s31, %s32
      %p36 = pneg %p30
      %p37 = scmp.eq.s32.totalorder %s21, 1
      %p38 = por %p36, %p37
      %p39 = scmp.ne.s32.totalorder %s31, %s34
      %p40 = scmp.eq.s32.totalorder %s21, 0
      %p41 = por %p39, %p40
      %p42 = scmp.ne.s32.totalorder %s31, %s34
      %p43 = scmp.eq.s32.totalorder %s26, 1
      %p44 = por %p42, %p43
      %p45 = scmp.ne.s32.totalorder %s34, %s35
      %p46 = scmp.eq.s32.totalorder %s26, 0
      %p47 = por %p45, %p46
      %p48 = scmp.ne.s32.totalorder %s34, %s35
      %p49 = scmp.eq.s32.totalorder %s27, 1
      %p50 = por %p48, %p49
      %p52 = scmp.ne.s32.totalorder %s35, %s51
      %p53 = scmp.eq.s32.totalorder %s27, 0
      %p54 = por %p52, %p53
      %s55 = ssub.s32 %s21, %s28
      %p56 = scmp.eq.s32.totalorder %s55, 0
      %s58 = sadd.s32 %s57, 1
      %s59 = scalar_select %p56, %s57, %s58
      %p62 = pneg %p56
      %p63 = scmp.eq.s32.totalorder %s21, 1
      %p64 = por %p62, %p63
      %p65 = scmp.ne.s32.totalorder %s57, %s60
      %p66 = scmp.eq.s32.totalorder %s21, 0
      %p67 = por %p65, %p66
      %p68 = scmp.ne.s32.totalorder %s57, %s60
      %p69 = scmp.eq.s32.totalorder %s26, 1
      %p70 = por %p68, %p69
      %p71 = scmp.ne.s32.totalorder %s60, %s61
      %p72 = scmp.eq.s32.totalorder %s26, 0
      %p73 = por %p71, %p72
      %p74 = scmp.ne.s32.totalorder %s60, %s61
      %p75 = scmp.eq.s32.totalorder %s27, 1
      %p76 = por %p74, %p75
      %p78 = scmp.ne.s32.totalorder %s61, %s77
      %p79 = scmp.eq.s32.totalorder %s27, 0
      %p80 = por %p78, %p79
      %s82 = sadd.s32 %s81, 1
      %p85 = scmp.eq.s32.totalorder %s21, 1
      %p86 = scmp.ne.s32.totalorder %s81, %s83
      %p87 = scmp.eq.s32.totalorder %s21, 0
      %p88 = por %p86, %p87
      %p89 = scmp.ne.s32.totalorder %s81, %s83
      %p90 = scmp.eq.s32.totalorder %s26, 1
      %p91 = por %p89, %p90
      %p92 = scmp.ne.s32.totalorder %s83, %s84
      %p93 = scmp.eq.s32.totalorder %s26, 0
      %p94 = por %p92, %p93
      %p95 = scmp.ne.s32.totalorder %s83, %s84
      %p96 = scmp.eq.s32.totalorder %s27, 1
      %p97 = por %p95, %p96
      %p99 = scmp.ne.s32.totalorder %s84, %s98
      %p100 = scmp.eq.s32.totalorder %s27, 0
      %p101 = por %p99, %p100
      %s103 = sadd.s32 %s102, 1
      %p106 = scmp.eq.s32.totalorder %s21, 1
      %p107 = scmp.ne.s32.totalorder %s102, %s104
      %p108 = scmp.eq.s32.totalorder %s21, 0
      %p109 = por %p107, %p108
      %p110 = scmp.ne.s32.totalorder %s102, %s104
      %p111 = scmp.eq.s32.totalorder %s26, 1
      %p112 = por %p110, %p111
      %p113 = scmp.ne.s32.totalorder %s104, %s105
      %p114 = scmp.eq.s32.totalorder %s26, 0
      %p115 = por %p113, %p114
      %p116 = scmp.ne.s32.totalorder %s104, %s105
      %p117 = scmp.eq.s32.totalorder %s27, 1
      %p118 = por %p116, %p117
      %p120 = scmp.ne.s32.totalorder %s105, %s119
      %p121 = scmp.eq.s32.totalorder %s27, 0
      %p122 = por %p120, %p121
      %s124 = sadd.s32 %s123, 1
      %p127 = scmp.eq.s32.totalorder %s21, 1
      %p128 = scmp.ne.s32.totalorder %s123, %s125
      %p129 = scmp.eq.s32.totalorder %s21, 0
      %p130 = por %p128, %p129
      %p131 = scmp.ne.s32.totalorder %s123, %s125
      %p132 = scmp.eq.s32.totalorder %s26, 1
      %p133 = por %p131, %p132
      %p134 = scmp.ne.s32.totalorder %s125, %s126
      %p135 = scmp.eq.s32.totalorder %s26, 0
      %p136 = por %p134, %p135
      %p137 = scmp.ne.s32.totalorder %s125, %s126
      %p138 = scmp.eq.s32.totalorder %s27, 1
      %p139 = por %p137, %p138
      %p141 = scmp.ne.s32.totalorder %s126, %s140
      %p142 = scmp.eq.s32.totalorder %s27, 0
      %p143 = por %p141, %p142
      %s145 = sadd.s32 %s144, 1
      %p148 = scmp.eq.s32.totalorder %s21, 1
      %p149 = scmp.ne.s32.totalorder %s144, %s146
      %p150 = scmp.eq.s32.totalorder %s21, 0
      %p151 = por %p149, %p150
      %p152 = scmp.ne.s32.totalorder %s144, %s146
      %p153 = scmp.eq.s32.totalorder %s26, 1
      %p154 = por %p152, %p153
      %p155 = scmp.ne.s32.totalorder %s146, %s147
      %p156 = scmp.eq.s32.totalorder %s26, 0
      %p157 = por %p155, %p156
      %p158 = scmp.ne.s32.totalorder %s146, %s147
      %p159 = scmp.eq.s32.totalorder %s27, 1
      %p160 = por %p158, %p159
      %p162 = scmp.ne.s32.totalorder %s147, %s161
      %p163 = scmp.eq.s32.totalorder %s27, 0
      %p164 = por %p162, %p163
      %s165 = ssub.s32 %s21, %s28
      %p166 = scmp.eq.s32.totalorder %s165, 0
      %s168 = sadd.s32 %s167, 1
      %s169 = scalar_select %p166, %s167, %s168
      %p172 = pneg %p166
      %p173 = scmp.eq.s32.totalorder %s21, 1
      %p174 = por %p172, %p173
      %p175 = scmp.ne.s32.totalorder %s167, %s170
      %p176 = scmp.eq.s32.totalorder %s21, 0
      %p177 = por %p175, %p176
      %p178 = scmp.ne.s32.totalorder %s167, %s170
      %p179 = scmp.eq.s32.totalorder %s26, 1
      %p180 = por %p178, %p179
      %p181 = scmp.ne.s32.totalorder %s170, %s171
      %p182 = scmp.eq.s32.totalorder %s26, 0
      %p183 = por %p181, %p182
      %p184 = scmp.ne.s32.totalorder %s170, %s171
      %p185 = scmp.eq.s32.totalorder %s27, 1
      %p186 = por %p184, %p185
      %p188 = scmp.ne.s32.totalorder %s171, %s187
      %p189 = scmp.eq.s32.totalorder %s27, 0
      %p190 = por %p188, %p189
      %p191 = scmp.le.s32.totalorder 1, %s21
      %p192 = scmp.lt.s32.totalorder %s21, 3
      %p193 = pnand %p191, %p192
      %p194 = pneg %p193
      // Predicated region
      $region9: #{tpu_custom_call.1} parent=5 // pred_check
        _
      $region10: #{tpu_custom_call.1} parent=5 // pred_check_branch
        %196 = sbr.rel (%p193) target = $region12
      $region11: #{tpu_custom_call.1} parent=5 // pred_region
        %s197 = ssub.s32 %s21, 1
        // Predicated region
        $region13: #{tpu_custom_call.1} parent=11 // pred_check
          %p198 = pneg %p94
        $region14: #{tpu_custom_call.1} parent=11 // pred_check_branch
          %200 = sbr.rel (%p198) target = $region16
        $region15: #{tpu_custom_call.1} parent=11 // pred_region
          _
        $region16: #{tpu_custom_call.1} parent=11 // pred_fallthru
          _
        // Predicated region
        $region17: #{tpu_custom_call.1} parent=11 // pred_check
          %p201 = pneg %p115
        $region18: #{tpu_custom_call.1} parent=11 // pred_check_branch
          %203 = sbr.rel (%p201) target = $region20
        $region19: #{tpu_custom_call.1} parent=11 // pred_region
          _
        $region20: #{tpu_custom_call.1} parent=11 // pred_fallthru
          _
        // Predicated region
        $region21: #{tpu_custom_call.1} parent=11 // pred_check
          %p204 = pneg %p136
        $region22: #{tpu_custom_call.1} parent=11 // pred_check_branch
          %206 = sbr.rel (%p204) target = $region24
        $region23: #{tpu_custom_call.1} parent=11 // pred_region
          %s208 = ssub.s32 512, 512
          %209 = vsyncadd [#allocation6], %s208
          %s210 = sshll.u32 [#allocation7], 4
          %s211 = int_to_ptr.vmem [resolvable:$true] %s210
          %216 = dma.hbm_to_vmem [thread:$0]  %s4, 512, %s211, [#allocation6], 128, 128, 8
        $region24: #{tpu_custom_call.1} parent=11 // pred_fallthru
          _
        // Predicated region
        $region25: #{tpu_custom_call.1} parent=11 // pred_check
          %p217 = pneg %p157
        $region26: #{tpu_custom_call.1} parent=11 // pred_check_branch
          %219 = sbr.rel (%p217) target = $region28
        $region27: #{tpu_custom_call.1} parent=11 // pred_region
          _
        $region28: #{tpu_custom_call.1} parent=11 // pred_fallthru
          _
      $region12: #{tpu_custom_call.1} parent=5 // pred_fallthru
        _
      %p220 = scmp.lt.s32.totalorder %s21, 2
      // Predicated region
      $region29: #{tpu_custom_call.1} parent=5 // pred_check
        %p221 = pneg %p220
      $region30: #{tpu_custom_call.1} parent=5 // pred_check_branch
        %223 = sbr.rel (%p221) target = $region32
      $region31: #{tpu_custom_call.1} parent=5 // pred_region
        // Predicated region
        $region33: #{tpu_custom_call.1} parent=31 // pred_check
          %p224 = pneg %p41
        $region34: #{tpu_custom_call.1} parent=31 // pred_check_branch
          %226 = sbr.rel (%p224) target = $region36
        $region35: #{tpu_custom_call.1} parent=31 // pred_region
          %s227 = sand.u32 %s31, 1
          %s228 = scalar_lea.sflag [#allocation3], %s227
          %s229 = sand.u32 %s31, 1
          %s230 = smul.addr %s229, 16
          %s231 = scalar_lea.vmem [#allocation2], %s230
          %s233 = ssub.s32 256, 256
          %234 = vsyncadd %s228, %s233
          %s235 = smul.addr %s21, 2
          %s236 = smul.addr %s235, 128
          %s237 = scalar_lea.hbm %s0, %s236
          %s238 = sshll.u32 %s231, 4
          %s239 = int_to_ptr.vmem [resolvable:$true] %s238
          %244 = dma.hbm_to_vmem [thread:$0]  %s237, 256, %s239, %s228, 128, 128, 8
        $region36: #{tpu_custom_call.1} parent=31 // pred_fallthru
          _
        // Predicated region
        $region37: #{tpu_custom_call.1} parent=31 // pred_check
          %p245 = pneg %p67
        $region38: #{tpu_custom_call.1} parent=31 // pred_check_branch
          %247 = sbr.rel (%p245) target = $region40
        $region39: #{tpu_custom_call.1} parent=31 // pred_region
          %s248 = sand.u32 %s21, 1
          %s249 = scalar_lea.sflag [#allocation6], %s248
          %s250 = sand.u32 %s57, 1
          %s251 = smul.addr %s250, 16
          %s252 = scalar_lea.vmem [#allocation5], %s251
          %s254 = ssub.s32 256, 256
          %255 = vsyncadd %s249, %s254
          %s256 = smul.addr %s21, 2
          %s257 = smul.addr %s256, 128
          %s258 = scalar_lea.hbm %s1, %s257
          %s259 = sshll.u32 %s252, 4
          %s260 = int_to_ptr.vmem [resolvable:$true] %s259
          %265 = dma.hbm_to_vmem [thread:$0]  %s258, 256, %s260, %s249, 128, 128, 8
        $region40: #{tpu_custom_call.1} parent=31 // pred_fallthru
          _
      $region32: #{tpu_custom_call.1} parent=5 // pred_fallthru
        _
      %p266 = scmp.le.s32.totalorder 1, %s21
      %p267 = scmp.lt.s32.totalorder %s21, 3
      %p268 = pnand %p266, %p267
      %p269 = pneg %p268
      // Predicated region
      $region41: #{tpu_custom_call.1} parent=5 // pred_check
        _
      $region42: #{tpu_custom_call.1} parent=5 // pred_check_branch
        %271 = sbr.rel (%p268) target = $region44
      $region43: #{tpu_custom_call.1} parent=5 // pred_region
        %s272 = ssub.s32 %s21, 1
        %s273 = sand.u32 %s34, 1
        %s274 = scalar_lea.sflag [#allocation3], %s273
        %s275 = sand.u32 %s34, 1
        %s276 = smul.addr %s275, 16
        %s277 = scalar_lea.vmem [#allocation2], %s276
        // Predicated region
        $region45: #{tpu_custom_call.1} parent=43 // pred_check
          %p278 = pneg %p47
        $region46: #{tpu_custom_call.1} parent=43 // pred_check_branch
          %280 = sbr.rel (%p278) target = $region48
        $region47: #{tpu_custom_call.1} parent=43 // pred_region
          %281 = dma.done %s274, 256
        $region48: #{tpu_custom_call.1} parent=43 // pred_fallthru
          _
        %s282 = sand.u32 %s26, 1
        %s283 = scalar_lea.sflag [#allocation6], %s282
        %s284 = sand.u32 %s60, 1
        %s285 = smul.addr %s284, 16
        %s286 = scalar_lea.vmem [#allocation5], %s285
        // Predicated region
        $region49: #{tpu_custom_call.1} parent=43 // pred_check
          %p287 = pneg %p73
        $region50: #{tpu_custom_call.1} parent=43 // pred_check_branch
          %289 = sbr.rel (%p287) target = $region52
        $region51: #{tpu_custom_call.1} parent=43 // pred_region
          %290 = dma.done %s283, 256
        $region52: #{tpu_custom_call.1} parent=43 // pred_fallthru
          _
        // Predicated region
        $region53: #{tpu_custom_call.1} parent=43 // pred_check
          %p291 = pneg %p136
        $region54: #{tpu_custom_call.1} parent=43 // pred_check_branch
          %293 = sbr.rel (%p291) target = $region56
        $region55: #{tpu_custom_call.1} parent=43 // pred_region
          %294 = dma.done [#allocation6], 512
        $region56: #{tpu_custom_call.1} parent=43 // pred_fallthru
          _
        %s295 = sand.u32 %s34, 1
        %s296 = scalar_lea.sflag [#allocation3], %s295
        %s297 = sand.u32 %s34, 1
        %s298 = smul.addr %s297, 16
        %s299 = scalar_lea.vmem [#allocation2], %s298
        %p300 = pneg %p47
        %p301 = pneg %p44
        %s302 = sand.u32 %s26, 1
        %s303 = scalar_lea.sflag [#allocation6], %s302
        %s304 = sand.u32 %s60, 1
        %s305 = smul.addr %s304, 16
        %s306 = scalar_lea.vmem [#allocation5], %s305
        %p307 = pneg %p73
        %p308 = pneg %p70
        %p309 = pneg %p94
        %p310 = pneg %p91
        %p311 = pneg %p115
        %p312 = pneg %p112
        %p313 = pneg %p136
        %p314 = pneg %p133
        %p315 = pneg %p157
        %p316 = pneg %p154
        %p317 = pneg %p183
        %p318 = pneg %p180
        %s319 = sand.u32 %s170, 1
        %s320 = scalar_lea.sflag [#allocation4], %s319
        %s321 = sand.u32 %s170, 1
        %s322 = smul.addr %s321, 32
        %s323 = scalar_lea.vmem [#allocation8], %s322
        %v325 = vld [vmem:[%s277] sm:$0xff]
        %v326 = vld [vmem:[%s277 + $0x8] sm:$0xff]
        %v327 = vld [vmem:[%s286] sm:$0xff]
        %v328 = vld [vmem:[%s286 + $0x8] sm:$0xff]
        %v329 = vld [vmem:[%s2] sm:$0x1]
        %v330 = vld [vmem:[%s3] sm:$0x1]
        %vm331 = vcmask 261120
        %v332 = vsel %vm331, %v327, 0.0
        %333 = vadd.xlane.f32.xlu0 %v332
        %v334 = vpop.xlane.xlu0 %333
        %v335 = vsel %vm331, %v328, 0.0
        %336 = vadd.xlane.f32.xlu0 %v335
        %v337 = vpop.xlane.xlu0 %336
        %v338 = vrcp.pop 32.0
        %v339 = vmul.f32 %v334, %v338
        %v340 = vmul.f32 %v337, %v338
        %v341 = vsub.f32 %v327, %v339
        %v342 = vsub.f32 %v328, %v340
        %v343 = vmul.f32 %v341, %v341
        %v344 = vmul.f32 %v342, %v342
        %v345 = vsel %vm331, %v343, 0.0
        %346 = vadd.xlane.f32.xlu0 %v345
        %v347 = vpop.xlane.xlu0 %346
        %v348 = vsel %vm331, %v344, 0.0
        %349 = vadd.xlane.f32.xlu0 %v348
        %v350 = vpop.xlane.xlu0 %349
        %v351 = vmul.f32 %v347, %v338
        %v352 = vmul.f32 %v350, %v338
        %v353 = vadd.f32 %v351, 1e-05
        %v354 = vadd.f32 %v352, 1e-05
        %v355 = vrsqrt.pop %v353
        %v356 = vrsqrt.pop %v354
        %v358 = vlaneseq
        %v359 = vshrl.u32 %v358, 7
        %v360 = vsub.s32 0, %v359
        %v361 = vrot.slane %v329, %v360
        %v363 = vmul.f32 %v361, %v355
        %v364 = vmul.f32 %v361, %v356
        %v365 = vmul.f32 %v341, %v363
        %v366 = vmul.f32 %v342, %v364
        %v368 = vlaneseq
        %v369 = vshrl.u32 %v368, 7
        %v370 = vsub.s32 0, %v369
        %v371 = vrot.slane %v330, %v370
        %v373 = vadd.f32 %v365, %v371
        %v374 = vadd.f32 %v366, %v371
        %v375 = vpack.c.bf16 %v374, %v373
        %v376 = vld [vmem:[#allocation7] sm:$0xff]
        %v377 = vld [vmem:[#allocation7 + $0x8] sm:$0xff]
        %v378 = vld [vmem:[#allocation7 + $0x10] sm:$0xff]
        %v379 = vld [vmem:[#allocation7 + $0x18] sm:$0xff]
        %v380 = vld [vmem:[%s5] sm:$0x3]
        %v382 = vlaneseq
        %v383 = vshrl.u32 %v382, 7
        %v384 = vsub.s32 0, %v383
        %v385 = vrot.slane %v380, %v384
        %v386 = vlaneseq
        %v387 = vshrl.u32 %v386, 7
        %v388 = vsub.s32 1, %v387
        %v389 = vrot.slane %v380, %v388
        %v396 = vunpack.c.l.b16 %v376
        %v397 = vunpack.c.h.b16 %v376
        %v398 = vunpack.c.l.b16 %v377
        %v399 = vunpack.c.h.b16 %v377
        %v400 = vunpack.c.l.b16 %v378
        %v401 = vunpack.c.h.b16 %v378
        %v402 = vunpack.c.l.b16 %v379
        %v403 = vunpack.c.h.b16 %v379
        %v404 = vpack.c.b16 %v398, %v396
        %v405 = vpack.c.b16 %v399, %v397
        %v406 = vpack.c.b16 %v402, %v400
        %v407 = vpack.c.b16 %v403, %v401
        %v413 = vsel %vm331, %v375, 0
        %415 = vmatprep.subr.bf16.mxu0 %v405
        %416 = vmatpush1.bf16.msra.mxu0 %v404
        %417 = vmatprep.subr.bf16.mxu0 %v407
        %418 = vmatpush1.bf16.msra.mxu0 %v406
        %419 = vmatprep.subr.bf16.mxu0 0
        %420 = vmatpush1.bf16.msra.mxu0 0
        %421 = vmatprep.subr.bf16.mxu0 0
        %422 = vmatpush1.bf16.msra.mxu0 0
        %423 = vmatprep.subr.bf16.mxu0 0
        %424 = vmatpush1.bf16.msra.mxu0 0
        %425 = vmatprep.subr.bf16.mxu0 0
        %426 = vmatpush1.bf16.msra.mxu0 0
        %427 = vmatprep.subr.bf16.mxu0 0
        %428 = vmatpush1.bf16.msra.mxu0 0
        %429 = vmatprep.subr.bf16.mxu0 0
        %430 = vmatpush1.bf16.msra.mxu0 0
        %431 = vmatprep.subr.bf16.mxu0 0
        %432 = vmatpush1.bf16.msra.mxu0 0
        %433 = vmatprep.subr.bf16.mxu0 0
        %434 = vmatpush1.bf16.msra.mxu0 0
        %435 = vmatprep.subr.bf16.mxu0 0
        %436 = vmatpush1.bf16.msra.mxu0 0
        %437 = vmatprep.subr.bf16.mxu0 0
        %438 = vmatpush1.bf16.msra.mxu0 0
        %439 = vmatprep.subr.bf16.mxu0 0
        %440 = vmatpush1.bf16.msra.mxu0 0
        %441 = vmatprep.subr.bf16.mxu0 0
        %442 = vmatpush1.bf16.msra.mxu0 0
        %443 = vmatprep.subr.bf16.mxu0 0
        %444 = vmatpush1.bf16.msra.mxu0 0
        %445 = vmatprep.subr.bf16.mxu0 0
        %446 = vmatpush1.bf16.msra.mxu0 0
        %447 = vmatprep.mubr.bf16.mxu0 0
        %448 = vmatmul.mubr.bf16.gmra.mrb[0].mxu0 %v413
        %v449 = vpop.f32.mrb[0].mxu0
        %v450 = vadd.f32 %v385, %v449
        %v451 = vpop.f32.mrb[0].mxu0
        %v452 = vadd.f32 %v389, %v451
        %v453 = vpop.f32.mrb[0].mxu0
        %v454 = vadd.f32 %v385, %v453
        %v455 = vpop.f32.mrb[0].mxu0
        %v456 = vadd.f32 %v389, %v455
        %457 = vdwg.mxu0
        %v458 = vpack.c.bf16 %v454, %v450
        %v459 = vpack.c.bf16 %v456, %v452
        %v461 = vsel %vm331, %v458, 0
        %v464 = vsel %vm331, %v459, 0
        %466 = vmatprep.subr.bf16.mxu0 0
        %467 = vmatpush1.bf16.xpose.msra.mxu0 %v464
        %468 = vmatprep.subr.bf16.mxu0 0
        %469 = vmatpush1.bf16.xpose.msra.mxu0 0
        %470 = vmatprep.subr.bf16.mxu0 0
        %471 = vmatpush1.bf16.xpose.msra.mxu0 0
        %472 = vmatprep.subr.bf16.mxu0 0
        %473 = vmatpush1.bf16.xpose.msra.mxu0 0
        %474 = vmatprep.subr.bf16.mxu0 0
        %475 = vmatpush1.bf16.xpose.msra.mxu0 0
        %476 = vmatprep.subr.bf16.mxu0 0
        %477 = vmatpush1.bf16.xpose.msra.mxu0 0
        %478 = vmatprep.subr.bf16.mxu0 0
        %479 = vmatpush1.bf16.xpose.msra.mxu0 0
        %480 = vmatprep.subr.bf16.mxu0 0
        %481 = vmatpush1.bf16.xpose.msra.mxu0 0
        %482 = vmatprep.subr.bf16.mxu0 0
        %483 = vmatpush1.bf16.xpose.msra.mxu0 0
        %484 = vmatprep.subr.bf16.mxu0 0
        %485 = vmatpush1.bf16.xpose.msra.mxu0 0
        %486 = vmatprep.subr.bf16.mxu0 0
        %487 = vmatpush1.bf16.xpose.msra.mxu0 0
        %488 = vmatprep.subr.bf16.mxu0 0
        %489 = vmatpush1.bf16.xpose.msra.mxu0 0
        %490 = vmatprep.subr.bf16.mxu0 0
        %491 = vmatpush1.bf16.xpose.msra.mxu0 0
        %492 = vmatprep.subr.bf16.mxu0 0
        %493 = vmatpush1.bf16.xpose.msra.mxu0 0
        %494 = vmatprep.subr.bf16.mxu0 0
        %495 = vmatpush1.bf16.xpose.msra.mxu0 0
        %496 = vmatprep.subr.bf16.mxu0 0
        %497 = vmatpush1.bf16.xpose.msra.mxu0 0
        %498 = vmatprep.mubr.bf16.mxu0 0
        %499 = vmatmul.mubr.bf16.gmra.mrb[0].mxu0 %v461
        %v500 = vpop.f32.mrb[0].mxu0
        %v501 = vadd.f32 0.0, %v500
        %v502 = vpop.f32.mrb[0].mxu0
        %v503 = vpop.f32.mrb[0].mxu0
        %v504 = vadd.f32 0.0, %v503
        %v505 = vpop.f32.mrb[0].mxu0
        %506 = vdwg.mxu0
        %vm507 = vcmp.gt.f32.partialorder %v325, 64.0
        %vm508 = vcmp.gt.f32.partialorder %v326, 64.0
        %v509 = vsel %vm507, -3.4028235e+38, %v501
        %v510 = vsel %vm508, -3.4028235e+38, %v504
        %vm511 = vcmask 130048
        %v512 = vsel %vm511, %v509, -inf
        %513 = vmax.xlane.f32.xlu0 %v512
        %v514 = vpop.xlane.xlu0 %513
        %v515 = vsel %vm511, %v510, -inf
        %516 = vmax.xlane.f32.xlu0 %v515
        %v517 = vpop.xlane.xlu0 %516
        %v518 = vsub.f32 %v509, %v514
        %v519 = vsub.f32 %v510, %v517
        %v520 = vmul.f32 %v518, 1.442695
        %v521 = vpow.pop %v520
        %v522 = vmul.f32 %v519, 1.442695
        %v523 = vpow.pop %v522
        %v524 = vsel %vm511, %v521, 0.0
        %525 = vadd.xlane.f32.xlu0 %v524
        %v526 = vpop.xlane.xlu0 %525
        %v527 = vsel %vm511, %v523, 0.0
        %528 = vadd.xlane.f32.xlu0 %v527
        %v529 = vpop.xlane.xlu0 %528
        %v530 = vrcp.pop %v526
        %v531 = vrcp.pop %v529
        %v532 = vmul.f32 %v521, %v530
        %v533 = vmul.f32 %v523, %v531
        %v534 = vpack.c.bf16 %v533, %v532
        %v536 = vunpack.c.l.b16 %v534
        %v537 = vunpack.c.h.b16 %v534
        %v538 = vpack.c.b16 %v536, %v536
        %v539 = vpack.c.b16 %v537, %v537
        %vm542 = vcmask 125952
        %543 = vst.msk [vmem:[%s323] sm:$0xf] %vm542, %v538
        %544 = vst.msk [vmem:[%s323 + $0x4] sm:$0xf] %vm542, %v539
        %546 = vrot.lane.b32.xlu0 %v458, 96
        %v547 = vpop.permute.xlu0 %546
        %549 = vrot.lane.b32.xlu0 %v459, 96
        %v550 = vpop.permute.xlu0 %549
        %v552 = vsel %vm331, %v547, 0
        %v555 = vsel %vm331, %v550, 0
        %557 = vmatprep.subr.bf16.mxu0 0
        %558 = vmatpush1.bf16.xpose.msra.mxu0 %v555
        %559 = vmatprep.subr.bf16.mxu0 0
        %560 = vmatpush1.bf16.xpose.msra.mxu0 0
        %561 = vmatprep.subr.bf16.mxu0 0
        %562 = vmatpush1.bf16.xpose.msra.mxu0 0
        %563 = vmatprep.subr.bf16.mxu0 0
        %564 = vmatpush1.bf16.xpose.msra.mxu0 0
        %565 = vmatprep.subr.bf16.mxu0 0
        %566 = vmatpush1.bf16.xpose.msra.mxu0 0
        %567 = vmatprep.subr.bf16.mxu0 0
        %568 = vmatpush1.bf16.xpose.msra.mxu0 0
        %569 = vmatprep.subr.bf16.mxu0 0
        %570 = vmatpush1.bf16.xpose.msra.mxu0 0
        %571 = vmatprep.subr.bf16.mxu0 0
        %572 = vmatpush1.bf16.xpose.msra.mxu0 0
        %573 = vmatprep.subr.bf16.mxu0 0
        %574 = vmatpush1.bf16.xpose.msra.mxu0 0
        %575 = vmatprep.subr.bf16.mxu0 0
        %576 = vmatpush1.bf16.xpose.msra.mxu0 0
        %577 = vmatprep.subr.bf16.mxu0 0
        %578 = vmatpush1.bf16.xpose.msra.mxu0 0
        %579 = vmatprep.subr.bf16.mxu0 0
        %580 = vmatpush1.bf16.xpose.msra.mxu0 0
        %581 = vmatprep.subr.bf16.mxu0 0
        %582 = vmatpush1.bf16.xpose.msra.mxu0 0
        %583 = vmatprep.subr.bf16.mxu0 0
        %584 = vmatpush1.bf16.xpose.msra.mxu0 0
        %585 = vmatprep.subr.bf16.mxu0 0
        %586 = vmatpush1.bf16.xpose.msra.mxu0 0
        %587 = vmatprep.subr.bf16.mxu0 0
        %588 = vmatpush1.bf16.xpose.msra.mxu0 0
        %589 = vmatprep.mubr.bf16.mxu0 0
        %590 = vmatmul.mubr.bf16.gmra.mrb[0].mxu0 %v552
        %v591 = vpop.f32.mrb[0].mxu0
        %v592 = vadd.f32 0.0, %v591
        %v593 = vpop.f32.mrb[0].mxu0
        %v594 = vpop.f32.mrb[0].mxu0
        %v595 = vadd.f32 0.0, %v594
        %v596 = vpop.f32.mrb[0].mxu0
        %597 = vdwg.mxu0
        %vm598 = vcmp.gt.f32.partialorder %v325, 144.0
        %vm599 = vcmp.gt.f32.partialorder %v326, 144.0
        %v600 = vsel %vm598, -3.4028235e+38, %v592
        %v601 = vsel %vm599, -3.4028235e+38, %v595
        %v602 = vsel %vm511, %v600, -inf
        %603 = vmax.xlane.f32.xlu0 %v602
        %v604 = vpop.xlane.xlu0 %603
        %v605 = vsel %vm511, %v601, -inf
        %606 = vmax.xlane.f32.xlu0 %v605
        %v607 = vpop.xlane.xlu0 %606
        %v608 = vsub.f32 %v600, %v604
        %v609 = vsub.f32 %v601, %v607
        %v610 = vmul.f32 %v608, 1.442695
        %v611 = vpow.pop %v610
        %v612 = vmul.f32 %v609, 1.442695
        %v613 = vpow.pop %v612
        %v614 = vsel %vm511, %v611, 0.0
        %615 = vadd.xlane.f32.xlu0 %v614
        %v616 = vpop.xlane.xlu0 %615
        %v617 = vsel %vm511, %v613, 0.0
        %618 = vadd.xlane.f32.xlu0 %v617
        %v619 = vpop.xlane.xlu0 %618
        %v620 = vrcp.pop %v616
        %v621 = vrcp.pop %v619
        %v622 = vmul.f32 %v611, %v620
        %v623 = vmul.f32 %v613, %v621
        %v624 = vpack.c.bf16 %v623, %v622
        %v626 = vunpack.c.l.b16 %v624
        %v627 = vunpack.c.h.b16 %v624
        %v628 = vpack.c.b16 %v626, %v626
        %v629 = vpack.c.b16 %v627, %v627
        %s632 = scalar_lea.vmem %s323, 8 [#allocation8]
        %633 = vst.msk [vmem:[%s632] sm:$0xf] %vm542, %v628
        %634 = vst.msk [vmem:[%s632 + $0x4] sm:$0xf] %vm542, %v629
        %635 = vrot.lane.b32.xlu0 %v458, 64
        %v636 = vpop.permute.xlu0 %635
        %637 = vrot.lane.b32.xlu0 %v459, 64
        %v638 = vpop.permute.xlu0 %637
        %v640 = vsel %vm331, %v636, 0
        %v643 = vsel %vm331, %v638, 0
        %645 = vmatprep.subr.bf16.mxu0 0
        %646 = vmatpush1.bf16.xpose.msra.mxu0 %v643
        %647 = vmatprep.subr.bf16.mxu0 0
        %648 = vmatpush1.bf16.xpose.msra.mxu0 0
        %649 = vmatprep.subr.bf16.mxu0 0
        %650 = vmatpush1.bf16.xpose.msra.mxu0 0
        %651 = vmatprep.subr.bf16.mxu0 0
        %652 = vmatpush1.bf16.xpose.msra.mxu0 0
        %653 = vmatprep.subr.bf16.mxu0 0
        %654 = vmatpush1.bf16.xpose.msra.mxu0 0
        %655 = vmatprep.subr.bf16.mxu0 0
        %656 = vmatpush1.bf16.xpose.msra.mxu0 0
        %657 = vmatprep.subr.bf16.mxu0 0
        %658 = vmatpush1.bf16.xpose.msra.mxu0 0
        %659 = vmatprep.subr.bf16.mxu0 0
        %660 = vmatpush1.bf16.xpose.msra.mxu0 0
        %661 = vmatprep.subr.bf16.mxu0 0
        %662 = vmatpush1.bf16.xpose.msra.mxu0 0
        %663 = vmatprep.subr.bf16.mxu0 0
        %664 = vmatpush1.bf16.xpose.msra.mxu0 0
        %665 = vmatprep.subr.bf16.mxu0 0
        %666 = vmatpush1.bf16.xpose.msra.mxu0 0
        %667 = vmatprep.subr.bf16.mxu0 0
        %668 = vmatpush1.bf16.xpose.msra.mxu0 0
        %669 = vmatprep.subr.bf16.mxu0 0
        %670 = vmatpush1.bf16.xpose.msra.mxu0 0
        %671 = vmatprep.subr.bf16.mxu0 0
        %672 = vmatpush1.bf16.xpose.msra.mxu0 0
        %673 = vmatprep.subr.bf16.mxu0 0
        %674 = vmatpush1.bf16.xpose.msra.mxu0 0
        %675 = vmatprep.subr.bf16.mxu0 0
        %676 = vmatpush1.bf16.xpose.msra.mxu0 0
        %677 = vmatprep.mubr.bf16.mxu0 0
        %678 = vmatmul.mubr.bf16.gmra.mrb[0].mxu0 %v640
        %v679 = vpop.f32.mrb[0].mxu0
        %v680 = vadd.f32 0.0, %v679
        %v681 = vpop.f32.mrb[0].mxu0
        %v682 = vpop.f32.mrb[0].mxu0
        %v683 = vadd.f32 0.0, %v682
        %v684 = vpop.f32.mrb[0].mxu0
        %685 = vdwg.mxu0
        %vm686 = vcmp.gt.f32.partialorder %v325, 256.0
        %vm687 = vcmp.gt.f32.partialorder %v326, 256.0
        %v688 = vsel %vm686, -3.4028235e+38, %v680
        %v689 = vsel %vm687, -3.4028235e+38, %v683
        %v690 = vsel %vm511, %v688, -inf
        %691 = vmax.xlane.f32.xlu0 %v690
        %v692 = vpop.xlane.xlu0 %691
        %v693 = vsel %vm511, %v689, -inf
        %694 = vmax.xlane.f32.xlu0 %v693
        %v695 = vpop.xlane.xlu0 %694
        %v696 = vsub.f32 %v688, %v692
        %v697 = vsub.f32 %v689, %v695
        %v698 = vmul.f32 %v696, 1.442695
        %v699 = vpow.pop %v698
        %v700 = vmul.f32 %v697, 1.442695
        %v701 = vpow.pop %v700
        %v702 = vsel %vm511, %v699, 0.0
        %703 = vadd.xlane.f32.xlu0 %v702
        %v704 = vpop.xlane.xlu0 %703
        %v705 = vsel %vm511, %v701, 0.0
        %706 = vadd.xlane.f32.xlu0 %v705
        %v707 = vpop.xlane.xlu0 %706
        %v708 = vrcp.pop %v704
        %v709 = vrcp.pop %v707
        %v710 = vmul.f32 %v699, %v708
        %v711 = vmul.f32 %v701, %v709
        %v712 = vpack.c.bf16 %v711, %v710
        %v714 = vunpack.c.l.b16 %v712
        %v715 = vunpack.c.h.b16 %v712
        %v716 = vpack.c.b16 %v714, %v714
        %v717 = vpack.c.b16 %v715, %v715
        %s720 = scalar_lea.vmem %s323, 16 [#allocation8]
        %721 = vst.msk [vmem:[%s720] sm:$0xf] %vm542, %v716
        %722 = vst.msk [vmem:[%s720 + $0x4] sm:$0xf] %vm542, %v717
        %723 = vrot.lane.b32.xlu0 %v458, 32
        %v724 = vpop.permute.xlu0 %723
        %725 = vrot.lane.b32.xlu0 %v459, 32
        %v726 = vpop.permute.xlu0 %725
        %v728 = vsel %vm331, %v724, 0
        %v731 = vsel %vm331, %v726, 0
        %733 = vmatprep.subr.bf16.mxu0 0
        %734 = vmatpush1.bf16.xpose.msra.mxu0 %v731
        %735 = vmatprep.subr.bf16.mxu0 0
        %736 = vmatpush1.bf16.xpose.msra.mxu0 0
        %737 = vmatprep.subr.bf16.mxu0 0
        %738 = vmatpush1.bf16.xpose.msra.mxu0 0
        %739 = vmatprep.subr.bf16.mxu0 0
        %740 = vmatpush1.bf16.xpose.msra.mxu0 0
        %741 = vmatprep.subr.bf16.mxu0 0
        %742 = vmatpush1.bf16.xpose.msra.mxu0 0
        %743 = vmatprep.subr.bf16.mxu0 0
        %744 = vmatpush1.bf16.xpose.msra.mxu0 0
        %745 = vmatprep.subr.bf16.mxu0 0
        %746 = vmatpush1.bf16.xpose.msra.mxu0 0
        %747 = vmatprep.subr.bf16.mxu0 0
        %748 = vmatpush1.bf16.xpose.msra.mxu0 0
        %749 = vmatprep.subr.bf16.mxu0 0
        %750 = vmatpush1.bf16.xpose.msra.mxu0 0
        %751 = vmatprep.subr.bf16.mxu0 0
        %752 = vmatpush1.bf16.xpose.msra.mxu0 0
        %753 = vmatprep.subr.bf16.mxu0 0
        %754 = vmatpush1.bf16.xpose.msra.mxu0 0
        %755 = vmatprep.subr.bf16.mxu0 0
        %756 = vmatpush1.bf16.xpose.msra.mxu0 0
        %757 = vmatprep.subr.bf16.mxu0 0
        %758 = vmatpush1.bf16.xpose.msra.mxu0 0
        %759 = vmatprep.subr.bf16.mxu0 0
        %760 = vmatpush1.bf16.xpose.msra.mxu0 0
        %761 = vmatprep.subr.bf16.mxu0 0
        %762 = vmatpush1.bf16.xpose.msra.mxu0 0
        %763 = vmatprep.subr.bf16.mxu0 0
        %764 = vmatpush1.bf16.xpose.msra.mxu0 0
        %765 = vmatprep.mubr.bf16.mxu0 0
        %766 = vmatmul.mubr.bf16.gmra.mrb[0].mxu0 %v728
        %v767 = vpop.f32.mrb[0].mxu0
        %v768 = vadd.f32 0.0, %v767
        %v769 = vpop.f32.mrb[0].mxu0
        %v770 = vpop.f32.mrb[0].mxu0
        %v771 = vadd.f32 0.0, %v770
        %v772 = vpop.f32.mrb[0].mxu0
        %773 = vdwg.mxu0
        %vm774 = vcmp.gt.f32.partialorder %v325, 400.0
        %vm775 = vcmp.gt.f32.partialorder %v326, 400.0
        %v776 = vsel %vm774, -3.4028235e+38, %v768
        %v777 = vsel %vm775, -3.4028235e+38, %v771
        %v778 = vsel %vm511, %v776, -inf
        %779 = vmax.xlane.f32.xlu0 %v778
        %v780 = vpop.xlane.xlu0 %779
        %v781 = vsel %vm511, %v777, -inf
        %782 = vmax.xlane.f32.xlu0 %v781
        %v783 = vpop.xlane.xlu0 %782
        %v784 = vsub.f32 %v776, %v780
        %v785 = vsub.f32 %v777, %v783
        %v786 = vmul.f32 %v784, 1.442695
        %v787 = vpow.pop %v786
        %v788 = vmul.f32 %v785, 1.442695
        %v789 = vpow.pop %v788
        %v790 = vsel %vm511, %v787, 0.0
        %791 = vadd.xlane.f32.xlu0 %v790
        %v792 = vpop.xlane.xlu0 %791
        %v793 = vsel %vm511, %v789, 0.0
        %794 = vadd.xlane.f32.xlu0 %v793
        %v795 = vpop.xlane.xlu0 %794
        %v796 = vrcp.pop %v792
        %v797 = vrcp.pop %v795
        %v798 = vmul.f32 %v787, %v796
        %v799 = vmul.f32 %v789, %v797
        %v800 = vpack.c.bf16 %v799, %v798
        %v802 = vunpack.c.l.b16 %v800
        %v803 = vunpack.c.h.b16 %v800
        %v804 = vpack.c.b16 %v802, %v802
        %v805 = vpack.c.b16 %v803, %v803
        %s808 = scalar_lea.vmem %s323, 24 [#allocation8]
        %809 = vst.msk [vmem:[%s808] sm:$0xf] %vm542, %v804
        %810 = vst.msk [vmem:[%s808 + $0x4] sm:$0xf] %vm542, %v805
        %s811 = sand.u32 %s170, 1
        %s812 = scalar_lea.sflag [#allocation4], %s811
        %s813 = sand.u32 %s170, 1
        %s814 = smul.addr %s813, 32
        %s815 = scalar_lea.vmem [#allocation8], %s814
        // Predicated region
        $region57: #{tpu_custom_call.1} parent=43 // pred_check
          %p816 = pneg %p180
        $region58: #{tpu_custom_call.1} parent=43 // pred_check_branch
          %818 = sbr.rel (%p816) target = $region60
        $region59: #{tpu_custom_call.1} parent=43 // pred_region
          %s820 = ssub.s32 512, 512
          %821 = vsyncadd %s812, %s820
          %s822 = smul.addr %s26, 8
          %s823 = smul.addr %s822, 64
          %s824 = scalar_lea.hbm %s6, %s823
          %s825 = sshll.u32 %s815, 4
          %s826 = int_to_ptr.vmem [resolvable:$true] %s825
          %831 = dma.vmem_to_hbm [thread:$0]  %s826, 512, %s824, %s812, 64, 64, 4
        $region60: #{tpu_custom_call.1} parent=43 // pred_fallthru
          _
      $region44: #{tpu_custom_call.1} parent=5 // pred_fallthru
        _
      %p832 = scmp.le.s32.totalorder 2, %s21
      // Predicated region
      $region61: #{tpu_custom_call.1} parent=5 // pred_check
        %p833 = pneg %p832
      $region62: #{tpu_custom_call.1} parent=5 // pred_check_branch
        %835 = sbr.rel (%p833) target = $region64
      $region63: #{tpu_custom_call.1} parent=5 // pred_region
        %s836 = ssub.s32 %s21, 2
        // Predicated region
        $region65: #{tpu_custom_call.1} parent=63 // pred_check
          %p837 = pneg %p186
        $region66: #{tpu_custom_call.1} parent=63 // pred_check_branch
          %839 = sbr.rel (%p837) target = $region68
        $region67: #{tpu_custom_call.1} parent=63 // pred_region
          %s840 = sand.u32 %s171, 1
          %s841 = scalar_lea.sflag [#allocation4], %s840
          %s842 = sand.u32 %s171, 1
          %s843 = smul.addr %s842, 32
          %s844 = scalar_lea.vmem [#allocation8], %s843
          %845 = dma.done %s841, 512
        $region68: #{tpu_custom_call.1} parent=63 // pred_fallthru
          _
      $region64: #{tpu_custom_call.1} parent=5 // pred_fallthru
        _
    $region6: #{tpu_custom_call.1} parent=1 // loop_footer
      %s25 = sadd.s32 1, %s21
    $region7: #{tpu_custom_call.1} parent=1 // loop_footer_branch
      %20 = sbr.rel target = $region3
    $region8: #{tpu_custom_call.1} parent=1 // loop_exit
      _
    %846 = vsyncpa [#allocation3], 1
    %s847 = scalar_lea.sflag [#allocation3], 1
    %848 = vsyncpa %s847, 1
    %849 = vsyncpa [#allocation6], 1
    %s850 = scalar_lea.sflag [#allocation6], 1
    %851 = vsyncpa %s850, 1
    %852 = vsyncpa [#allocation4], 1
    %s853 = scalar_lea.sflag [#allocation4], 1
    %854 = vsyncpa %s853, 1

</llo_original>
